<compile_context>
chip_gen: v7x
topology: tpu7x:2x2x1
jax: 0.10.0
libtpu: 0.0.40
codegen_flags: <defaults>
</compile_context>

<pallas_src>
import jax
import jax.numpy as jnp
from jax.experimental import pallas as pl
from jax.experimental.pallas import tpu as pltpu


# 4096 rows x 128 lanes = 512K points per tile: 8 MiB input block + 4 MiB
# output block, x2 for double buffering ~ 24 MiB, well under the 48 MiB limit
# requested below (v7x-safe; v5e/v6e have more physical VMEM).
_MAX_TILE_ROWS = 4096
_VMEM_LIMIT_BYTES = 48 * 1024 * 1024


def _cdiv(a, b):
    return -(-a // b)


def _project_kernel(w_ref, x_ref, o_ref):
    """One (batch, row-tile) grid step.

    w_ref: SMEM (B*8,)         inv(pose)[b, :2, :] flattened, 8 scalars/batch
    x_ref: VMEM (1, 4, R, 128) coordinate planes, points lane- and sublane-dense
    o_ref: VMEM (1, 2, R, 128) projected camera x / y planes
    """
    base = pl.program_id(0) * 8          # grid axis 0 == batch index
    x0 = x_ref[0, 0]                     # (R, 128) dense planes
    x1 = x_ref[0, 1]
    x2 = x_ref[0, 2]
    x3 = x_ref[0, 3]
    o_ref[0, 0] = (w_ref[base + 0] * x0 + w_ref[base + 1] * x1
                   + w_ref[base + 2] * x2 + w_ref[base + 3] * x3)
    o_ref[0, 1] = (w_ref[base + 4] * x0 + w_ref[base + 5] * x1
                   + w_ref[base + 6] * x2 + w_ref[base + 7] * x3)


def orthogonal_project(x, pose):
    """x: (B, P, N, 4), pose: (B, 4, 4)  ->  (B, P, N, 2) float32."""
    B, P, N, K = x.shape
    assert K == 4 and pose.shape == (B, 4, 4)
    # The kernel assumes f32 (sublane tiling + SMEM scalar path): cast up front.
    x = x.astype(jnp.float32)
    pose = pose.astype(jnp.float32)

    # decode_pose is identity in the reference module.
    inv = jnp.linalg.inv(pose)                       # (B, 4, 4)
    w = inv[:, :2, :].reshape(B * 8)                 # 1-D SMEM table (no 2-D padding blowup)

    # --- row tiling over the flattened point axis -------------------------
    M = P * N
    n_rows = _cdiv(M, 128)                           # rows of 128 lane-dense points
    if n_rows <= _MAX_TILE_ROWS:
        n_tiles, tile_rows = 1, n_rows               # full-extent block
    else:
        n_tiles = _cdiv(n_rows, _MAX_TILE_ROWS)
        tile_rows = _cdiv(_cdiv(n_rows, n_tiles), 8) * 8   # sublane multiple
    # Megacore: keep >= 2 grid steps when the shape allows it (v7x: 2 TCs).
    if B * n_tiles < 2 and tile_rows >= 16 and tile_rows % 16 == 0:
        n_tiles *= 2
        tile_rows //= 2
    rows_pad = n_tiles * tile_rows
    m_pad = rows_pad * 128

    # --- layout plumbing: one relayout copy, pad only if actually ragged ---
    xt = jnp.transpose(x.reshape(B, M, 4), (0, 2, 1))          # (B, 4, M)
    if m_pad != M:
        xt = jnp.pad(xt, ((0, 0), (0, 0), (0, m_pad - M)))
    xt = xt.reshape(B, 4, rows_pad, 128)                       # free view

    cost = pl.CostEstimate(
        flops=14 * B * m_pad,
        transcendentals=0,
        bytes_accessed=(16 + 8) * B * m_pad + 32 * B,
    )

    out_t = pl.pallas_call(
        _project_kernel,
        out_shape=jax.ShapeDtypeStruct((B, 2, rows_pad, 128), jnp.float32),
        grid=(B, n_tiles),
        in_specs=[
            pl.BlockSpec(memory_space=pltpu.MemorySpace.SMEM),           # w
            pl.BlockSpec((1, 4, tile_rows, 128), lambda b, t: (b, 0, t, 0)),
        ],
        out_specs=pl.BlockSpec((1, 2, tile_rows, 128), lambda b, t: (b, 0, t, 0)),
        compiler_params=pltpu.CompilerParams(
            dimension_semantics=("parallel", "parallel"),
            vmem_limit_bytes=_VMEM_LIMIT_BYTES,
        ),
        cost_estimate=cost,
    )(w, xt)

    out = out_t.reshape(B, 2, m_pad)[:, :, :M].reshape(B, 2, P, N)
    return jnp.transpose(out, (0, 2, 3, 1))                    # (B, P, N, 2)


if __name__ == "__main__":
    key = jax.random.PRNGKey(0)
    kx, kp = jax.random.split(key)

    # Small but lane-friendly demo shapes: M = P*N = 256 -> 2 dense rows,
    # no padding, grid (B=2, tiles=1) so both "parallel" axes are exercised.
    B, P, N = 2, 4, 64
    x = jax.random.normal(kx, (B, P, N, 4), dtype=jnp.float32)
    # Well-conditioned invertible poses (identity + small perturbation).
    pose = jnp.eye(4, dtype=jnp.float32)[None] + \
        0.1 * jax.random.normal(kp, (B, 4, 4), dtype=jnp.float32)

    out = orthogonal_project(x, pose)
    jax.block_until_ready(out)

    # Pure-JAX reference of the PyTorch forward.
    ref = jnp.einsum("bpnk,bjk->bpnj", x, jnp.linalg.inv(pose))[..., :2]
    assert out.shape == (B, P, N, 2)
    assert jnp.allclose(out, ref, atol=1e-4, rtol=1e-4)

    print("KERNEL_OK")
</pallas_src>

<mosaic_0001>
module attributes {stable_mosaic.version = 11 : i64} {
  func.func @_project_kernel(%arg0: i32, %arg1: i32, %arg2: memref<16xf32, #tpu.memory_space<smem>>, %arg3: memref<1x4x2x128xf32, #tpu.memory_space<vmem>>, %arg4: memref<1x2x2x128xf32, #tpu.memory_space<vmem>>) attributes {dimension_semantics = [#tpu.dimension_semantics<parallel>, #tpu.dimension_semantics<parallel>], iteration_bounds = array<i64: 2, 1>, scalar_prefetch = 0 : i64, scratch_operands = 0 : i64, tpu.core_type = #tpu.core_type<tc>, window_params = [{transform_indices = @transform_0, window_bounds = array<i64: 16>}, {transform_indices = @transform_1, window_bounds = array<i64: 1, 4, 2, 128>}, {transform_indices = @transform_2, window_bounds = array<i64: 1, 2, 2, 128>}]} {
    %c8_i32 = arith.constant 8 : i32
    %0 = arith.muli %arg0, %c8_i32 : i32
    %c0 = arith.constant 0 : index
    %c0_0 = arith.constant 0 : index
    %c0_1 = arith.constant 0 : index
    %c0_2 = arith.constant 0 : index
    %1 = vector.load %arg3[%c0, %c0_0, %c0_1, %c0_2] : memref<1x4x2x128xf32, #tpu.memory_space<vmem>>, vector<1x1x2x128xf32>
    %2 = vector.shape_cast %1 : vector<1x1x2x128xf32> to vector<2x128xf32>
    %c0_3 = arith.constant 0 : index
    %c1 = arith.constant 1 : index
    %c0_4 = arith.constant 0 : index
    %c0_5 = arith.constant 0 : index
    %3 = vector.load %arg3[%c0_3, %c1, %c0_4, %c0_5] : memref<1x4x2x128xf32, #tpu.memory_space<vmem>>, vector<1x1x2x128xf32>
    %4 = vector.shape_cast %3 : vector<1x1x2x128xf32> to vector<2x128xf32>
    %c0_6 = arith.constant 0 : index
    %c2 = arith.constant 2 : index
    %c0_7 = arith.constant 0 : index
    %c0_8 = arith.constant 0 : index
    %5 = vector.load %arg3[%c0_6, %c2, %c0_7, %c0_8] : memref<1x4x2x128xf32, #tpu.memory_space<vmem>>, vector<1x1x2x128xf32>
    %6 = vector.shape_cast %5 : vector<1x1x2x128xf32> to vector<2x128xf32>
    %c0_9 = arith.constant 0 : index
    %c3 = arith.constant 3 : index
    %c0_10 = arith.constant 0 : index
    %c0_11 = arith.constant 0 : index
    %7 = vector.load %arg3[%c0_9, %c3, %c0_10, %c0_11] : memref<1x4x2x128xf32, #tpu.memory_space<vmem>>, vector<1x1x2x128xf32>
    %8 = vector.shape_cast %7 : vector<1x1x2x128xf32> to vector<2x128xf32>
    %c0_i32 = arith.constant 0 : i32
    %9 = arith.addi %0, %c0_i32 : i32
    %10 = arith.index_cast %9 : i32 to index
    %11 = memref.load %arg2[%10] : memref<16xf32, #tpu.memory_space<smem>>
    %12 = vector.broadcast %11 : f32 to vector<2x128xf32>
    %13 = arith.mulf %12, %2 : vector<2x128xf32>
    %c1_i32 = arith.constant 1 : i32
    %14 = arith.addi %0, %c1_i32 : i32
    %15 = arith.index_cast %14 : i32 to index
    %16 = memref.load %arg2[%15] : memref<16xf32, #tpu.memory_space<smem>>
    %17 = vector.broadcast %16 : f32 to vector<2x128xf32>
    %18 = arith.mulf %17, %4 : vector<2x128xf32>
    %19 = arith.addf %13, %18 : vector<2x128xf32>
    %c2_i32 = arith.constant 2 : i32
    %20 = arith.addi %0, %c2_i32 : i32
    %21 = arith.index_cast %20 : i32 to index
    %22 = memref.load %arg2[%21] : memref<16xf32, #tpu.memory_space<smem>>
    %23 = vector.broadcast %22 : f32 to vector<2x128xf32>
    %24 = arith.mulf %23, %6 : vector<2x128xf32>
    %25 = arith.addf %19, %24 : vector<2x128xf32>
    %c3_i32 = arith.constant 3 : i32
    %26 = arith.addi %0, %c3_i32 : i32
    %27 = arith.index_cast %26 : i32 to index
    %28 = memref.load %arg2[%27] : memref<16xf32, #tpu.memory_space<smem>>
    %29 = vector.broadcast %28 : f32 to vector<2x128xf32>
    %30 = arith.mulf %29, %8 : vector<2x128xf32>
    %31 = arith.addf %25, %30 : vector<2x128xf32>
    %c0_12 = arith.constant 0 : index
    %c0_13 = arith.constant 0 : index
    %c0_14 = arith.constant 0 : index
    %c0_15 = arith.constant 0 : index
    %32 = vector.load %arg4[%c0_12, %c0_13, %c0_14, %c0_15] : memref<1x2x2x128xf32, #tpu.memory_space<vmem>>, vector<1x1x2x128xf32>
    %33 = vector.shape_cast %32 : vector<1x1x2x128xf32> to vector<2x128xf32>
    %34 = vector.shape_cast %31 : vector<2x128xf32> to vector<1x1x2x128xf32>
    tpu.vector_store %arg4[%c0_12, %c0_13, %c0_14, %c0_15], %34 {strides = array<i32>} : memref<1x2x2x128xf32, #tpu.memory_space<vmem>>, vector<1x1x2x128xf32>,
    %c4_i32 = arith.constant 4 : i32
    %35 = arith.addi %0, %c4_i32 : i32
    %36 = arith.index_cast %35 : i32 to index
    %37 = memref.load %arg2[%36] : memref<16xf32, #tpu.memory_space<smem>>
    %38 = vector.broadcast %37 : f32 to vector<2x128xf32>
    %39 = arith.mulf %38, %2 : vector<2x128xf32>
    %c5_i32 = arith.constant 5 : i32
    %40 = arith.addi %0, %c5_i32 : i32
    %41 = arith.index_cast %40 : i32 to index
    %42 = memref.load %arg2[%41] : memref<16xf32, #tpu.memory_space<smem>>
    %43 = vector.broadcast %42 : f32 to vector<2x128xf32>
    %44 = arith.mulf %43, %4 : vector<2x128xf32>
    %45 = arith.addf %39, %44 : vector<2x128xf32>
    %c6_i32 = arith.constant 6 : i32
    %46 = arith.addi %0, %c6_i32 : i32
    %47 = arith.index_cast %46 : i32 to index
    %48 = memref.load %arg2[%47] : memref<16xf32, #tpu.memory_space<smem>>
    %49 = vector.broadcast %48 : f32 to vector<2x128xf32>
    %50 = arith.mulf %49, %6 : vector<2x128xf32>
    %51 = arith.addf %45, %50 : vector<2x128xf32>
    %c7_i32 = arith.constant 7 : i32
    %52 = arith.addi %0, %c7_i32 : i32
    %53 = arith.index_cast %52 : i32 to index
    %54 = memref.load %arg2[%53] : memref<16xf32, #tpu.memory_space<smem>>
    %55 = vector.broadcast %54 : f32 to vector<2x128xf32>
    %56 = arith.mulf %55, %8 : vector<2x128xf32>
    %57 = arith.addf %51, %56 : vector<2x128xf32>
    %c0_16 = arith.constant 0 : index
    %c1_17 = arith.constant 1 : index
    %c0_18 = arith.constant 0 : index
    %c0_19 = arith.constant 0 : index
    %58 = vector.load %arg4[%c0_16, %c1_17, %c0_18, %c0_19] : memref<1x2x2x128xf32, #tpu.memory_space<vmem>>, vector<1x1x2x128xf32>
    %59 = vector.shape_cast %58 : vector<1x1x2x128xf32> to vector<2x128xf32>
    %60 = vector.shape_cast %57 : vector<2x128xf32> to vector<1x1x2x128xf32>
    tpu.vector_store %arg4[%c0_16, %c1_17, %c0_18, %c0_19], %60 {strides = array<i32>} : memref<1x2x2x128xf32, #tpu.memory_space<vmem>>, vector<1x1x2x128xf32>,
    return
  }
  func.func @transform_0(%arg0: i32, %arg1: i32) -> i32 {
    %c0_i32 = arith.constant 0 : i32
    %c0_i32_0 = arith.constant 0 : i32
    return %c0_i32 : i32
  }
  func.func @transform_1(%arg0: i32, %arg1: i32) -> (i32, i32, i32, i32) {
    %c0_i32 = arith.constant 0 : i32
    %c0_i32_0 = arith.constant 0 : i32
    %c0_i32_1 = arith.constant 0 : i32
    return %arg0, %c0_i32, %arg1, %c0_i32_0 : i32, i32, i32, i32
  }
  func.func @transform_2(%arg0: i32, %arg1: i32) -> (i32, i32, i32, i32) {
    %c0_i32 = arith.constant 0 : i32
    %c0_i32_0 = arith.constant 0 : i32
    %c0_i32_1 = arith.constant 0 : i32
    return %arg0, %c0_i32, %arg1, %c0_i32_0 : i32, i32, i32, i32
  }
}

</mosaic_0001>

<llo_original>
// kernel: tpu_custom_call.1
$region0: #{tpu_custom_call.1}
  #allocation0 [shape = 'u32[]', space=smem, size = 0x4, offset = 0x4, fixed_abs, tag = 'smem constant byte address 0x4 - core index']
  #allocation1 [shape = 'u32[144,128]{1,0:T(1,128)}', space=vmem, size = 0x12000, scoped, tag = 'internal scratch']
  %s0 = inlined_call_operand.hbm [shape: f32[16], index: 0, kind: input, shape index: {}]
  %s1 = inlined_call_operand.hbm [shape: f32[2,4,2,128], index: 1, kind: input, shape index: {}]
  %s2 = inlined_call_operand.hbm [shape: f32[2,2,2,128], index: 2, kind: output, shape index: {}]
  %s3 = sld [smem:[#allocation0]]
  $region49: #{tpu_custom_call.1} parent=0
    _
  %s5 = ssub.s32 1, %s3
  %s6 = scalar_select 0, %s5, %s3
  $region1: #{tpu_custom_call.1} parent=0
    #allocation2 [shape = 'u8[512]{0}', space=smem, size = 0x200, scoped, tag = 'input window, operand 0, single buffered']
    #allocation3 [shape = 's32[2]{0}', space=sflag, size = 0x8, scoped, tag = 'scoped memory for tpu_custom_call.1']
    #allocation4 [shape = 's32[2]{0}', space=sflag, size = 0x8, scoped, tag = 'scoped memory for tpu_custom_call.1']
    #allocation5 [shape = 's32[2]{0}', space=sflag, size = 0x8, scoped, tag = 'scoped memory for tpu_custom_call.1']
    #allocation6 [shape = 'u8[8192]{0}', space=vmem, size = 0x2000, scoped, tag = 'input window, operand 1']
    #allocation7 [shape = 'u8[4096]{0}', space=vmem, size = 0x1000, scoped, tag = 'output window, operand 0']
    %7 = vsyncpa [#allocation5], 0
    %8 = vsyncpa [#allocation3], 0
    %s9 = scalar_lea.sflag [#allocation3], 1
    %10 = vsyncpa %s9, 0
    %11 = vsyncpa [#allocation4], 0
    %s12 = scalar_lea.sflag [#allocation4], 1
    %13 = vsyncpa %s12, 0
    loop: start=0, step=1, limit=4
    $region2: #{tpu_custom_call.1} parent=1 // loop_pre_header
      _
    $region3: #{tpu_custom_call.1} parent=1 // loop_header
      %s15 = sphi 0, %s19
      %p16 = scmp.ge.s32.totalorder %s15, 4
      %s22 = sphi 0, %s34
      %s23 = sphi 0, %s30
      %s24 = sphi 0, %s22
      %s25 = sphi 0, %s23
      %s26 = sphi 0, %s24
      %s27 = sphi 0, %s25
      %s35 = sphi 0, %s35
      %s37 = sphi 0, %s35
      %s38 = sphi 0, %s37
      %s52 = sphi 0, %s38
      %s60 = sphi 0, %s62
      %s63 = sphi 0, %s60
      %s64 = sphi 0, %s63
      %s80 = sphi 0, %s64
      %s88 = sphi 0, %s90
      %s91 = sphi 0, %s88
      %s92 = sphi 0, %s91
      %s108 = sphi 0, %s92
    $region4: #{tpu_custom_call.1} parent=1 // loop_header_branch
      %18 = sbr.rel (%p16) target = $region8
    $region5: #{tpu_custom_call.1} parent=1 // loop_body
      %s20 = ssub.s32 %s15, 1
      %s21 = ssub.s32 %s15, 2
      %s28 = sadd.s32 1, %s23
      %p29 = scmp.ge.s32.totalorder %s28, 1
      %s30 = scalar_select %p29, 0, %s28
      %s31 = sadd.s32 1, %s22
      %s32 = scalar_select %p29, %s31, %s22
      %p33 = scmp.ge.s32.totalorder %s32, 2
      %s34 = scalar_select %p33, 0, %s32
      %s36 = sadd.s32 %s35, 1
      %p39 = scmp.eq.s32.totalorder %s15, 1
      %p40 = scmp.ne.s32.totalorder %s35, %s37
      %p41 = scmp.eq.s32.totalorder %s15, 0
      %p42 = por %p40, %p41
      %p43 = scmp.ne.s32.totalorder %s35, %s37
      %p44 = scmp.eq.s32.totalorder %s20, 1
      %p45 = por %p43, %p44
      %p46 = scmp.ne.s32.totalorder %s37, %s38
      %p47 = scmp.eq.s32.totalorder %s20, 0
      %p48 = por %p46, %p47
      %p49 = scmp.ne.s32.totalorder %s37, %s38
      %p50 = scmp.eq.s32.totalorder %s21, 1
      %p51 = por %p49, %p50
      %p53 = scmp.ne.s32.totalorder %s38, %s52
      %p54 = scmp.eq.s32.totalorder %s21, 0
      %p55 = por %p53, %p54
      %s56 = ssub.s32 %s22, %s34
      %s57 = ssub.s32 %s23, %s30
      %s58 = sor.u32 %s56, %s57
      %p59 = scmp.eq.s32.totalorder %s58, 0
      %s61 = sadd.s32 %s60, 1
      %s62 = scalar_select %p59, %s60, %s61
      %p65 = pneg %p59
      %p66 = scmp.eq.s32.totalorder %s15, 1
      %p67 = por %p65, %p66
      %p68 = scmp.ne.s32.totalorder %s60, %s63
      %p69 = scmp.eq.s32.totalorder %s15, 0
      %p70 = por %p68, %p69
      %p71 = scmp.ne.s32.totalorder %s60, %s63
      %p72 = scmp.eq.s32.totalorder %s20, 1
      %p73 = por %p71, %p72
      %p74 = scmp.ne.s32.totalorder %s63, %s64
      %p75 = scmp.eq.s32.totalorder %s20, 0
      %p76 = por %p74, %p75
      %p77 = scmp.ne.s32.totalorder %s63, %s64
      %p78 = scmp.eq.s32.totalorder %s21, 1
      %p79 = por %p77, %p78
      %p81 = scmp.ne.s32.totalorder %s64, %s80
      %p82 = scmp.eq.s32.totalorder %s21, 0
      %p83 = por %p81, %p82
      %s84 = ssub.s32 %s22, %s34
      %s85 = ssub.s32 %s23, %s30
      %s86 = sor.u32 %s84, %s85
      %p87 = scmp.eq.s32.totalorder %s86, 0
      %s89 = sadd.s32 %s88, 1
      %s90 = scalar_select %p87, %s88, %s89
      %p93 = pneg %p87
      %p94 = scmp.eq.s32.totalorder %s15, 1
      %p95 = por %p93, %p94
      %p96 = scmp.ne.s32.totalorder %s88, %s91
      %p97 = scmp.eq.s32.totalorder %s15, 0
      %p98 = por %p96, %p97
      %p99 = scmp.ne.s32.totalorder %s88, %s91
      %p100 = scmp.eq.s32.totalorder %s20, 1
      %p101 = por %p99, %p100
      %p102 = scmp.ne.s32.totalorder %s91, %s92
      %p103 = scmp.eq.s32.totalorder %s20, 0
      %p104 = por %p102, %p103
      %p105 = scmp.ne.s32.totalorder %s91, %s92
      %p106 = scmp.eq.s32.totalorder %s21, 1
      %p107 = por %p105, %p106
      %p109 = scmp.ne.s32.totalorder %s92, %s108
      %p110 = scmp.eq.s32.totalorder %s21, 0
      %p111 = por %p109, %p110
      %p112 = scmp.le.s32.totalorder 1, %s15
      %p113 = scmp.lt.s32.totalorder %s15, 3
      %p114 = pnand %p112, %p113
      %p115 = pneg %p114
      // Predicated region
      $region9: #{tpu_custom_call.1} parent=5 // pred_check
        _
      $region10: #{tpu_custom_call.1} parent=5 // pred_check_branch
        %117 = sbr.rel (%p114) target = $region12
      $region11: #{tpu_custom_call.1} parent=5 // pred_region
        %s118 = ssub.s32 %s15, 1
        // Predicated region
        $region13: #{tpu_custom_call.1} parent=11 // pred_check
          %p119 = pneg %p48
        $region14: #{tpu_custom_call.1} parent=11 // pred_check_branch
          %121 = sbr.rel (%p119) target = $region16
        $region15: #{tpu_custom_call.1} parent=11 // pred_region
          %s123 = ssub.s32 16, 16
          %124 = vsyncadd [#allocation5], %s123
          %127 = dma.hbm_to_smem %s0, 16, [#allocation2], [#allocation5]
        $region16: #{tpu_custom_call.1} parent=11 // pred_fallthru
          _
      $region12: #{tpu_custom_call.1} parent=5 // pred_fallthru
        _
      %p128 = scmp.lt.s32.totalorder %s15, 2
      // Predicated region
      $region17: #{tpu_custom_call.1} parent=5 // pred_check
        %p129 = pneg %p128
      $region18: #{tpu_custom_call.1} parent=5 // pred_check_branch
        %131 = sbr.rel (%p129) target = $region20
      $region19: #{tpu_custom_call.1} parent=5 // pred_region
        // Predicated region
        $region21: #{tpu_custom_call.1} parent=19 // pred_check
          %p132 = pneg %p70
        $region22: #{tpu_custom_call.1} parent=19 // pred_check_branch
          %134 = sbr.rel (%p132) target = $region24
        $region23: #{tpu_custom_call.1} parent=19 // pred_region
          %s135 = sand.u32 %s60, 1
          %s136 = scalar_lea.sflag [#allocation3], %s135
          %s137 = sand.u32 %s60, 1
          %s138 = smul.addr %s137, 8
          %s139 = scalar_lea.vmem [#allocation6], %s138
          %s141 = ssub.s32 128, 128
          %142 = vsyncadd %s136, %s141
          %s143 = smul.addr %s22, 4
          %s144 = sadd.s32 %s23, %s143
          %s145 = smul.addr %s144, 32
          %s146 = scalar_lea.hbm %s1, %s145
          %s147 = sshll.u32 %s139, 4
          %s148 = int_to_ptr.vmem [resolvable:$true] %s147
          %153 = dma.hbm_to_vmem [thread:$0]  %s146, 128, %s148, %s136, 32, 32, 2
        $region24: #{tpu_custom_call.1} parent=19 // pred_fallthru
          _
      $region20: #{tpu_custom_call.1} parent=5 // pred_fallthru
        _
      %p154 = scmp.le.s32.totalorder 1, %s15
      %p155 = scmp.lt.s32.totalorder %s15, 3
      %p156 = pnand %p154, %p155
      %p157 = pneg %p156
      // Predicated region
      $region25: #{tpu_custom_call.1} parent=5 // pred_check
        _
      $region26: #{tpu_custom_call.1} parent=5 // pred_check_branch
        %159 = sbr.rel (%p156) target = $region28
      $region27: #{tpu_custom_call.1} parent=5 // pred_region
        %s160 = ssub.s32 %s15, 1
        // Predicated region
        $region29: #{tpu_custom_call.1} parent=27 // pred_check
          %p161 = pneg %p48
        $region30: #{tpu_custom_call.1} parent=27 // pred_check_branch
          %163 = sbr.rel (%p161) target = $region32
        $region31: #{tpu_custom_call.1} parent=27 // pred_region
          %164 = dma.done [#allocation5], 16
        $region32: #{tpu_custom_call.1} parent=27 // pred_fallthru
          _
        %s165 = sand.u32 %s63, 1
        %s166 = scalar_lea.sflag [#allocation3], %s165
        %s167 = sand.u32 %s63, 1
        %s168 = smul.addr %s167, 8
        %s169 = scalar_lea.vmem [#allocation6], %s168
        // Predicated region
        $region33: #{tpu_custom_call.1} parent=27 // pred_check
          %p170 = pneg %p76
        $region34: #{tpu_custom_call.1} parent=27 // pred_check_branch
          %172 = sbr.rel (%p170) target = $region36
        $region35: #{tpu_custom_call.1} parent=27 // pred_region
          %173 = dma.done %s166, 128
        $region36: #{tpu_custom_call.1} parent=27 // pred_fallthru
          _
        %174 = sfence
        %p175 = pneg %p48
        %p176 = pneg %p45
        %s177 = sand.u32 %s63, 1
        %s178 = scalar_lea.sflag [#allocation3], %s177
        %s179 = sand.u32 %s63, 1
        %s180 = smul.addr %s179, 8
        %s181 = scalar_lea.vmem [#allocation6], %s180
        %p182 = pneg %p76
        %p183 = pneg %p73
        %p184 = pneg %p104
        %p185 = pneg %p101
        %s186 = sand.u32 %s91, 1
        %s187 = scalar_lea.sflag [#allocation4], %s186
        %s188 = sand.u32 %s91, 1
        %s189 = smul.addr %s188, 4
        %s190 = scalar_lea.vmem [#allocation7], %s189
        %s191 = smul.u32 %s24, 8
        %v192 = vld [vmem:[%s169] sm:$0x3]
        %s193 = scalar_lea.vmem %s169, 2 [#allocation6]
        %v194 = vld [vmem:[%s193] sm:$0x3]
        %s195 = scalar_lea.vmem %s169, 4 [#allocation6]
        %v196 = vld [vmem:[%s195] sm:$0x3]
        %s197 = scalar_lea.vmem %s169, 6 [#allocation6]
        %v198 = vld [vmem:[%s197] sm:$0x3]
        %s199 = sld [smem:[#allocation2 + %s191]]
        %v200 = vstv %s199
        %v201 = vmul.f32 %v200, %v192
        %s202 = sadd.s32 %s191, 1
        %s203 = sld [smem:[#allocation2 + %s202]]
        %v204 = vstv %s203
        %v205 = vmul.f32 %v204, %v194
        %v206 = vadd.f32 %v201, %v205
        %s207 = sadd.s32 %s191, 2
        %s208 = sld [smem:[#allocation2 + %s207]]
        %v209 = vstv %s208
        %v210 = vmul.f32 %v209, %v196
        %v211 = vadd.f32 %v206, %v210
        %s212 = sadd.s32 %s191, 3
        %s213 = sld [smem:[#allocation2 + %s212]]
        %v214 = vstv %s213
        %v215 = vmul.f32 %v214, %v198
        %v216 = vadd.f32 %v211, %v215
        %217 = vst [vmem:[%s190] sm:$0x3] %v216
        %s218 = sadd.s32 %s191, 4
        %s219 = sld [smem:[#allocation2 + %s218]]
        %v220 = vstv %s219
        %v221 = vmul.f32 %v220, %v192
        %s222 = sadd.s32 %s191, 5
        %s223 = sld [smem:[#allocation2 + %s222]]
        %v224 = vstv %s223
        %v225 = vmul.f32 %v224, %v194
        %v226 = vadd.f32 %v221, %v225
        %s227 = sadd.s32 %s191, 6
        %s228 = sld [smem:[#allocation2 + %s227]]
        %v229 = vstv %s228
        %v230 = vmul.f32 %v229, %v196
        %v231 = vadd.f32 %v226, %v230
        %s232 = sadd.s32 %s191, 7
        %s233 = sld [smem:[#allocation2 + %s232]]
        %v234 = vstv %s233
        %v235 = vmul.f32 %v234, %v198
        %v236 = vadd.f32 %v231, %v235
        %s237 = scalar_lea.vmem %s190, 2 [#allocation7]
        %238 = vst [vmem:[%s237] sm:$0x3] %v236
        %s239 = sand.u32 %s91, 1
        %s240 = scalar_lea.sflag [#allocation4], %s239
        %s241 = sand.u32 %s91, 1
        %s242 = smul.addr %s241, 4
        %s243 = scalar_lea.vmem [#allocation7], %s242
        // Predicated region
        $region37: #{tpu_custom_call.1} parent=27 // pred_check
          %p244 = pneg %p101
        $region38: #{tpu_custom_call.1} parent=27 // pred_check_branch
          %246 = sbr.rel (%p244) target = $region40
        $region39: #{tpu_custom_call.1} parent=27 // pred_region
          %s248 = ssub.s32 64, 64
          %249 = vsyncadd %s240, %s248
          %s250 = smul.addr %s24, 2
          %s251 = sadd.s32 %s25, %s250
          %s252 = smul.addr %s251, 32
          %s253 = scalar_lea.hbm %s2, %s252
          %s254 = sshll.u32 %s243, 4
          %s255 = int_to_ptr.vmem [resolvable:$true] %s254
          %260 = dma.vmem_to_hbm [thread:$0]  %s255, 64, %s253, %s240, 32, 32, 2
        $region40: #{tpu_custom_call.1} parent=27 // pred_fallthru
          _
      $region28: #{tpu_custom_call.1} parent=5 // pred_fallthru
        _
      %p261 = scmp.le.s32.totalorder 2, %s15
      // Predicated region
      $region41: #{tpu_custom_call.1} parent=5 // pred_check
        %p262 = pneg %p261
      $region42: #{tpu_custom_call.1} parent=5 // pred_check_branch
        %264 = sbr.rel (%p262) target = $region44
      $region43: #{tpu_custom_call.1} parent=5 // pred_region
        %s265 = ssub.s32 %s15, 2
        // Predicated region
        $region45: #{tpu_custom_call.1} parent=43 // pred_check
          %p266 = pneg %p107
        $region46: #{tpu_custom_call.1} parent=43 // pred_check_branch
          %268 = sbr.rel (%p266) target = $region48
        $region47: #{tpu_custom_call.1} parent=43 // pred_region
          %s269 = sand.u32 %s92, 1
          %s270 = scalar_lea.sflag [#allocation4], %s269
          %s271 = sand.u32 %s92, 1
          %s272 = smul.addr %s271, 4
          %s273 = scalar_lea.vmem [#allocation7], %s272
          %274 = dma.done %s270, 64
        $region48: #{tpu_custom_call.1} parent=43 // pred_fallthru
          _
      $region44: #{tpu_custom_call.1} parent=5 // pred_fallthru
        _
    $region6: #{tpu_custom_call.1} parent=1 // loop_footer
      %s19 = sadd.s32 1, %s15
    $region7: #{tpu_custom_call.1} parent=1 // loop_footer_branch
      %14 = sbr.rel target = $region3
    $region8: #{tpu_custom_call.1} parent=1 // loop_exit
      _
    %275 = vsyncpa [#allocation3], 1
    %s276 = scalar_lea.sflag [#allocation3], 1
    %277 = vsyncpa %s276, 1
    %278 = vsyncpa [#allocation4], 1
    %s279 = scalar_lea.sflag [#allocation4], 1
    %280 = vsyncpa %s279, 1
    %281 = vsyncpa [#allocation5], 1
    %s282 = scalar_lea.sflag [#allocation5], 1
    %283 = vsyncpa %s282, 1

</llo_original>
